<compile_context>
chip_gen: v6e
topology: v6e:2x2x1
jax: 0.10.0
libtpu: 0.0.40
codegen_flags: <defaults>
</compile_context>

<pallas_src>
import math

import numpy as np
import jax
import jax.numpy as jnp
from jax import lax
from jax.experimental import pallas as pl
from jax.experimental.pallas import tpu as pltpu


_LANE = 128           # lane width
_MAX_TILE_F = 2048    # max feature-tile width (multiple of 128)
_MIN_SPLIT_F = 512    # min tile width worth splitting for megacore (v7x)
_MAX_T_CHUNK = 128    # time rows per chunk == size of the decay matrix A


def _round_up(x: int, m: int) -> int:
    return ((x + m - 1) // m) * m


def _decay_matrices(alpha: float, t_chunk: int):
    """A[i,j] = (1-alpha)*alpha^(i-j) for j<=i else 0; p[i] = alpha^(i+1)."""
    a = float(alpha)
    idx = np.arange(t_chunk, dtype=np.int64)
    diff = idx[:, None] - idx[None, :]
    A = np.where(diff >= 0, (1.0 - a) * np.power(a, np.maximum(diff, 0)), 0.0)
    p = np.power(a, idx + 1).reshape(t_chunk, 1)
    return jnp.asarray(A, dtype=jnp.float32), jnp.asarray(p, dtype=jnp.float32)


def _make_kernel(t_chunk: int, total_t: int, mask_time: bool):
    def kernel(x_ref, s0_ref, a_ref, p_ref, out_ref, state_ref):
        t = pl.program_id(1)

        # (Re)initialize the f32 carry from the initial state at the first
        # time chunk of every feature tile.
        @pl.when(t == 0)
        def _():
            state_ref[...] = s0_ref[...]

        x = x_ref[...].astype(jnp.float32)                 # (t_chunk, f_tile)
        if mask_time:
            # Zero rows >= T in the ragged last time chunk so OOB garbage
            # (possibly NaN/Inf) cannot leak into valid rows through the
            # zero coefficients of A (0 * NaN = NaN inside the matmul).
            row = lax.broadcasted_iota(jnp.int32, x.shape, 0) + t * t_chunk
            x = jnp.where(row < total_t, x, 0.0)

        s = state_ref[...]                                  # (1, f_tile) f32
        out = jnp.dot(a_ref[...], x,
                      preferred_element_type=jnp.float32,
                      precision=lax.Precision.HIGHEST)      # fp32 MXU passes
        out = out + p_ref[...] * s                          # + alpha^(i+1) * carry
        out_ref[...] = out.astype(out_ref.dtype)
        # New carry = state after the last row of this chunk.
        state_ref[...] = out[t_chunk - 1:t_chunk, :]

    return kernel


def exponential_decay(x, state=None, *, alpha: float = 0.9):
    """Pallas implementation of ExponentialDecay.forward.

    x:     (T, ...) float array (time-major, like the PyTorch module).
    state: optional array of shape x.shape[1:]; defaults to x[0].
    Returns (out, final_state); out.shape == x.shape,
    final_state.shape == x.shape[1:].
    """
    orig_dtype = x.dtype
    orig_shape = x.shape
    T = int(x.shape[0])
    tail_shape = x.shape[1:]
    F = int(math.prod(tail_shape)) if tail_shape else 1

    if state is None:
        state = x[0]

    x2 = x.reshape(T, F)
    s2 = state.reshape(1, F).astype(jnp.float32)   # feed the carry seed as f32

    # Feature tiling: lane-dense, no wrapper padding (ragged last tile is
    # handled in-kernel / by Pallas OOB-write dropping).
    f_tile = min(_MAX_TILE_F, _round_up(F, _LANE))
    if pl.cdiv(F, f_tile) == 1 and f_tile >= 2 * _MIN_SPLIT_F:
        # Guarantee >= 2 feature tiles so the "parallel" axis can shard across
        # the two TensorCores on v7x.
        f_tile = _round_up(f_tile // 2, _LANE)
    n_f = pl.cdiv(F, f_tile)

    # Time chunking: whole T in one chunk when small, else 128-deep chunks
    # (the A matrix is t_chunk x t_chunk).
    t_chunk = T if T <= _MAX_T_CHUNK else _MAX_T_CHUNK
    n_t = pl.cdiv(T, t_chunk)
    mask_time = (T % t_chunk) != 0

    A, p = _decay_matrices(alpha, t_chunk)
    kernel = _make_kernel(t_chunk, T, mask_time)

    out2 = pl.pallas_call(
        kernel,
        out_shape=jax.ShapeDtypeStruct((T, F), orig_dtype),
        grid_spec=pltpu.PrefetchScalarGridSpec(
            num_scalar_prefetch=0,
            # Feature tiles first (parallel), time chunks last (sequential).
            grid=(n_f, n_t),
            in_specs=[
                pl.BlockSpec((t_chunk, f_tile), lambda f, t: (t, f)),   # x chunk
                pl.BlockSpec((1, f_tile), lambda f, t: (0, f)),         # init state (f32)
                pl.BlockSpec((t_chunk, t_chunk), lambda f, t: (0, 0)),  # A (decay matrix)
                pl.BlockSpec((t_chunk, 1), lambda f, t: (0, 0)),        # p = alpha^(i+1)
            ],
            out_specs=pl.BlockSpec((t_chunk, f_tile), lambda f, t: (t, f)),
            scratch_shapes=[pltpu.VMEM((1, f_tile), jnp.float32)],      # f32 carry
        ),
        compiler_params=pltpu.CompilerParams(
            dimension_semantics=("parallel", "arbitrary"),
        ),
    )(x2, s2, A, p)

    out = out2.reshape(orig_shape)
    final_state = out[T - 1]   # state after the last update (PyTorch semantics)
    return out, final_state


def exponential_decay_ref(x, state=None, *, alpha: float = 0.9):
    """Pure-JAX reference mirroring the PyTorch loop."""
    if state is None:
        state = x[0]

    def step(s, xt):
        s_new = xt * (1.0 - alpha) + s * alpha
        return s_new, s_new

    final_state, out = lax.scan(step, state, x)
    return out, final_state


if __name__ == "__main__":
    key = jax.random.PRNGKey(0)
    k1, k2, k3 = jax.random.split(key, 3)

    alpha = 0.9

    # Case 1: (T, C, H, W) = (8, 4, 16, 16), state=None (defaults to x[0]).
    x = jax.random.normal(k1, (8, 4, 16, 16), dtype=jnp.float32)
    out, fin = exponential_decay(x, None, alpha=alpha)
    out = jax.block_until_ready(out)
    fin = jax.block_until_ready(fin)
    out_r, fin_r = exponential_decay_ref(x, None, alpha=alpha)
    assert jnp.allclose(out, out_r, atol=1e-5, rtol=1e-5)
    assert jnp.allclose(fin, fin_r, atol=1e-5, rtol=1e-5)

    # Case 2: explicit initial state.
    state0 = jax.random.normal(k2, (4, 16, 16), dtype=jnp.float32)
    out2, fin2 = exponential_decay(x, state0, alpha=alpha)
    out2 = jax.block_until_ready(out2)
    fin2 = jax.block_until_ready(fin2)
    out2_r, fin2_r = exponential_decay_ref(x, state0, alpha=alpha)
    assert jnp.allclose(out2, out2_r, atol=1e-5, rtol=1e-5)
    assert jnp.allclose(fin2, fin2_r, atol=1e-5, rtol=1e-5)

    # Case 3: ragged feature tile (F=200 in a 256-wide tile) and ragged last
    # time chunk (T=200 -> chunks of 128 with in-kernel row masking + carry).
    x3 = jax.random.normal(k3, (200, 2, 10, 10), dtype=jnp.float32)
    out3, fin3 = exponential_decay(x3, None, alpha=alpha)
    out3 = jax.block_until_ready(out3)
    fin3 = jax.block_until_ready(fin3)
    out3_r, fin3_r = exponential_decay_ref(x3, None, alpha=alpha)
    assert jnp.allclose(out3, out3_r, atol=1e-5, rtol=1e-5)
    assert jnp.allclose(fin3, fin3_r, atol=1e-5, rtol=1e-5)

    print("KERNEL_OK")
</pallas_src>

<mosaic_0001>
module attributes {stable_mosaic.version = 11 : i64} {
  func.func @kernel(%arg0: i32, %arg1: i32, %arg2: memref<8x512xf32, #tpu.memory_space<vmem>>, %arg3: memref<1x512xf32, #tpu.memory_space<vmem>>, %arg4: memref<8x8xf32, #tpu.memory_space<vmem>>, %arg5: memref<8x1xf32, #tpu.memory_space<vmem>>, %arg6: memref<8x512xf32, #tpu.memory_space<vmem>>, %arg7: memref<1x512xf32, #tpu.memory_space<vmem>>) attributes {dimension_semantics = [#tpu.dimension_semantics<parallel>, #tpu.dimension_semantics<arbitrary>], iteration_bounds = array<i64: 2, 1>, scalar_prefetch = 0 : i64, scratch_operands = 1 : i64, tpu.core_type = #tpu.core_type<tc>, window_params = [{transform_indices = @transform_0, window_bounds = array<i64: 8, 512>}, {transform_indices = @transform_1, window_bounds = array<i64: 1, 512>}, {pipeline_mode = #tpu.pipeline_mode<synchronous>, transform_indices = @transform_2, window_bounds = array<i64: 8, 8>}, {pipeline_mode = #tpu.pipeline_mode<synchronous>, transform_indices = @transform_3, window_bounds = array<i64: 8, 1>}, {transform_indices = @transform_4, window_bounds = array<i64: 8, 512>}]} {
    %c0_i32 = arith.constant 0 : i32
    %0 = arith.cmpi eq, %arg1, %c0_i32 : i32
    %1 = arith.extui %0 : i1 to i32
    %c0_i32_0 = arith.constant 0 : i32
    %2 = arith.cmpi ne, %1, %c0_i32_0 : i32
    scf.if %2 {
      %c0_12 = arith.constant 0 : index
      %c0_13 = arith.constant 0 : index
      %15 = vector.load %arg3[%c0_12, %c0_13] : memref<1x512xf32, #tpu.memory_space<vmem>>, vector<1x512xf32>
      %c0_14 = arith.constant 0 : index
      %c0_15 = arith.constant 0 : index
      %16 = vector.load %arg7[%c0_14, %c0_15] : memref<1x512xf32, #tpu.memory_space<vmem>>, vector<1x512xf32>
      tpu.vector_store %arg7[%c0_14, %c0_15], %15 {strides = array<i32>} : memref<1x512xf32, #tpu.memory_space<vmem>>, vector<1x512xf32>,
    } else {
    }
    %c0 = arith.constant 0 : index
    %c0_1 = arith.constant 0 : index
    %3 = vector.load %arg2[%c0, %c0_1] : memref<8x512xf32, #tpu.memory_space<vmem>>, vector<8x512xf32>
    %c0_2 = arith.constant 0 : index
    %c0_3 = arith.constant 0 : index
    %4 = vector.load %arg7[%c0_2, %c0_3] : memref<1x512xf32, #tpu.memory_space<vmem>>, vector<1x512xf32>
    %c0_4 = arith.constant 0 : index
    %c0_5 = arith.constant 0 : index
    %5 = vector.load %arg4[%c0_4, %c0_5] : memref<8x8xf32, #tpu.memory_space<vmem>>, vector<8x8xf32>
    %cst = arith.constant dense<0.000000e+00> : vector<8x512xf32>
    %6 = tpu.matmul %5, %3, %cst {dimension_numbers = #tpu.dot_dimension_numbers<[1], [0], [0], [1], [0, 0, 1, 1], [], []>, precision = #tpu.contract_precision<fp32>} : vector<8x8xf32>, vector<8x512xf32>, vector<8x512xf32> -> vector<8x512xf32>
    %c0_6 = arith.constant 0 : index
    %c0_7 = arith.constant 0 : index
    %7 = vector.load %arg5[%c0_6, %c0_7] : memref<8x1xf32, #tpu.memory_space<vmem>>, vector<8x1xf32>
    %8 = vector.broadcast %7 : vector<8x1xf32> to vector<8x512xf32>
    %9 = vector.broadcast %4 : vector<1x512xf32> to vector<8x512xf32>
    %10 = arith.mulf %8, %9 : vector<8x512xf32>
    %11 = arith.addf %6, %10 : vector<8x512xf32>
    %c0_8 = arith.constant 0 : index
    %c0_9 = arith.constant 0 : index
    %12 = vector.load %arg6[%c0_8, %c0_9] : memref<8x512xf32, #tpu.memory_space<vmem>>, vector<8x512xf32>
    tpu.vector_store %arg6[%c0_8, %c0_9], %11 {strides = array<i32>} : memref<8x512xf32, #tpu.memory_space<vmem>>, vector<8x512xf32>,
    %13 = vector.extract_strided_slice %11 {offsets = [7, 0], sizes = [1, 512], strides = [1, 1]} : vector<8x512xf32> to vector<1x512xf32>
    %c0_10 = arith.constant 0 : index
    %c0_11 = arith.constant 0 : index
    %14 = vector.load %arg7[%c0_10, %c0_11] : memref<1x512xf32, #tpu.memory_space<vmem>>, vector<1x512xf32>
    tpu.vector_store %arg7[%c0_10, %c0_11], %13 {strides = array<i32>} : memref<1x512xf32, #tpu.memory_space<vmem>>, vector<1x512xf32>,
    return
  }
  func.func @transform_0(%arg0: i32, %arg1: i32) -> (i32, i32) {
    %c0_i32 = arith.constant 0 : i32
    return %arg1, %arg0 : i32, i32
  }
  func.func @transform_1(%arg0: i32, %arg1: i32) -> (i32, i32) {
    %c0_i32 = arith.constant 0 : i32
    %c0_i32_0 = arith.constant 0 : i32
    return %c0_i32, %arg0 : i32, i32
  }
  func.func @transform_2(%arg0: i32, %arg1: i32) -> (i32, i32) {
    %c0_i32 = arith.constant 0 : i32
    %c0_i32_0 = arith.constant 0 : i32
    %c0_i32_1 = arith.constant 0 : i32
    return %c0_i32, %c0_i32_0 : i32, i32
  }
  func.func @transform_3(%arg0: i32, %arg1: i32) -> (i32, i32) {
    %c0_i32 = arith.constant 0 : i32
    %c0_i32_0 = arith.constant 0 : i32
    %c0_i32_1 = arith.constant 0 : i32
    return %c0_i32, %c0_i32_0 : i32, i32
  }
  func.func @transform_4(%arg0: i32, %arg1: i32) -> (i32, i32) {
    %c0_i32 = arith.constant 0 : i32
    return %arg1, %arg0 : i32, i32
  }
}

</mosaic_0001>

<llo_original>
// kernel: tpu_custom_call.1
$region0: #{tpu_custom_call.1}
  #allocation0 [shape = 'u32[]', space=smem, size = 0x4, offset = 0x4, fixed_abs, tag = 'smem constant byte address 0x4 - core index']
  #allocation1 [shape = 'u32[144,128]{1,0:T(1,128)}', space=vmem, size = 0x12000, scoped, tag = 'internal scratch']
  #allocation2 [shape = 'f32[1,512]{1,0:T(1,128)}', space=vmem, size = 0x800, scoped, tag = 'scratch operand']
  %s0 = inlined_call_operand.hbm [shape: f32[8,1024], index: 0, kind: input, shape index: {}]
  %s1 = inlined_call_operand.vmem [shape: f32[1,1024], index: 1, kind: input, shape index: {}]
  %s2 = inlined_call_operand.hbm [shape: f32[8,8], index: 2, kind: input, shape index: {}]
  %s3 = inlined_call_operand.vmem [shape: f32[8,1], index: 3, kind: input, shape index: {}]
  %s4 = inlined_call_operand.hbm [shape: f32[8,1024], index: 4, kind: output, shape index: {}]
  %s5 = sld [smem:[#allocation0]]
  $region61: #{tpu_custom_call.1} parent=0
    _
  %s7 = ssub.s32 1, %s5
  %s8 = scalar_select 0, %s7, %s5
  $region1: #{tpu_custom_call.1} parent=0
    #allocation3 [shape = 'u8[32768]{0}', space=vmem, size = 0x8000, scoped, tag = 'input window, operand 0']
    #allocation4 [shape = 's32[2]{0}', space=sflag, size = 0x8, scoped, tag = 'scoped memory for tpu_custom_call.1']
    #allocation5 [shape = 's32[2]{0}', space=sflag, size = 0x8, scoped, tag = 'scoped memory for tpu_custom_call.1']
    #allocation6 [shape = 'u8[4096]{0}', space=vmem, size = 0x1000, scoped, tag = 'input window, operand 2, single buffered']
    #allocation7 [shape = 's32[1]{0}', space=sflag, size = 0x4, scoped, tag = 'scoped memory for tpu_custom_call.1']
    #allocation8 [shape = 'u8[32768]{0}', space=vmem, size = 0x8000, scoped, tag = 'output window, operand 0']
    %9 = vsyncpa [#allocation4], 0
    %s10 = scalar_lea.sflag [#allocation4], 1
    %11 = vsyncpa %s10, 0
    %12 = vsyncpa [#allocation7], 0
    %13 = vsyncpa [#allocation5], 0
    %s14 = scalar_lea.sflag [#allocation5], 1
    %15 = vsyncpa %s14, 0
    loop: start=0, step=1, limit=4
    $region2: #{tpu_custom_call.1} parent=1 // loop_pre_header
      _
    $region3: #{tpu_custom_call.1} parent=1 // loop_header
      %s17 = sphi 0, %s21
      %p18 = scmp.ge.s32.totalorder %s17, 4
      %s24 = sphi 0, %s36
      %s25 = sphi 0, %s32
      %s26 = sphi 0, %s24
      %s27 = sphi 0, %s25
      %s28 = sphi 0, %s26
      %s29 = sphi 0, %s27
      %s41 = sphi 0, %s43
      %s44 = sphi 0, %s41
      %s45 = sphi 0, %s44
      %s61 = sphi 0, %s45
      %s67 = sphi 0, %s69
      %s70 = sphi 0, %s67
      %s71 = sphi 0, %s70
      %s87 = sphi 0, %s71
      %s91 = sphi 0, %s91
      %s93 = sphi 0, %s91
      %s94 = sphi 0, %s93
      %s108 = sphi 0, %s94
      %s112 = sphi 0, %s112
      %s114 = sphi 0, %s112
      %s115 = sphi 0, %s114
      %s129 = sphi 0, %s115
      %s137 = sphi 0, %s139
      %s140 = sphi 0, %s137
      %s141 = sphi 0, %s140
      %s157 = sphi 0, %s141
    $region4: #{tpu_custom_call.1} parent=1 // loop_header_branch
      %20 = sbr.rel (%p18) target = $region8
    $region5: #{tpu_custom_call.1} parent=1 // loop_body
      %s22 = ssub.s32 %s17, 1
      %s23 = ssub.s32 %s17, 2
      %s30 = sadd.s32 1, %s25
      %p31 = scmp.ge.s32.totalorder %s30, 1
      %s32 = scalar_select %p31, 0, %s30
      %s33 = sadd.s32 1, %s24
      %s34 = scalar_select %p31, %s33, %s24
      %p35 = scmp.ge.s32.totalorder %s34, 2
      %s36 = scalar_select %p35, 0, %s34
      %s37 = ssub.s32 %s25, %s32
      %s38 = ssub.s32 %s24, %s36
      %s39 = sor.u32 %s37, %s38
      %p40 = scmp.eq.s32.totalorder %s39, 0
      %s42 = sadd.s32 %s41, 1
      %s43 = scalar_select %p40, %s41, %s42
      %p46 = pneg %p40
      %p47 = scmp.eq.s32.totalorder %s17, 1
      %p48 = por %p46, %p47
      %p49 = scmp.ne.s32.totalorder %s41, %s44
      %p50 = scmp.eq.s32.totalorder %s17, 0
      %p51 = por %p49, %p50
      %p52 = scmp.ne.s32.totalorder %s41, %s44
      %p53 = scmp.eq.s32.totalorder %s22, 1
      %p54 = por %p52, %p53
      %p55 = scmp.ne.s32.totalorder %s44, %s45
      %p56 = scmp.eq.s32.totalorder %s22, 0
      %p57 = por %p55, %p56
      %p58 = scmp.ne.s32.totalorder %s44, %s45
      %p59 = scmp.eq.s32.totalorder %s23, 1
      %p60 = por %p58, %p59
      %p62 = scmp.ne.s32.totalorder %s45, %s61
      %p63 = scmp.eq.s32.totalorder %s23, 0
      %p64 = por %p62, %p63
      %s65 = ssub.s32 %s24, %s36
      %p66 = scmp.eq.s32.totalorder %s65, 0
      %s68 = sadd.s32 %s67, 1
      %s69 = scalar_select %p66, %s67, %s68
      %p72 = pneg %p66
      %p73 = scmp.eq.s32.totalorder %s17, 1
      %p74 = por %p72, %p73
      %p75 = scmp.ne.s32.totalorder %s67, %s70
      %p76 = scmp.eq.s32.totalorder %s17, 0
      %p77 = por %p75, %p76
      %p78 = scmp.ne.s32.totalorder %s67, %s70
      %p79 = scmp.eq.s32.totalorder %s22, 1
      %p80 = por %p78, %p79
      %p81 = scmp.ne.s32.totalorder %s70, %s71
      %p82 = scmp.eq.s32.totalorder %s22, 0
      %p83 = por %p81, %p82
      %p84 = scmp.ne.s32.totalorder %s70, %s71
      %p85 = scmp.eq.s32.totalorder %s23, 1
      %p86 = por %p84, %p85
      %p88 = scmp.ne.s32.totalorder %s71, %s87
      %p89 = scmp.eq.s32.totalorder %s23, 0
      %p90 = por %p88, %p89
      %s92 = sadd.s32 %s91, 1
      %p95 = scmp.eq.s32.totalorder %s17, 1
      %p96 = scmp.ne.s32.totalorder %s91, %s93
      %p97 = scmp.eq.s32.totalorder %s17, 0
      %p98 = por %p96, %p97
      %p99 = scmp.ne.s32.totalorder %s91, %s93
      %p100 = scmp.eq.s32.totalorder %s22, 1
      %p101 = por %p99, %p100
      %p102 = scmp.ne.s32.totalorder %s93, %s94
      %p103 = scmp.eq.s32.totalorder %s22, 0
      %p104 = por %p102, %p103
      %p105 = scmp.ne.s32.totalorder %s93, %s94
      %p106 = scmp.eq.s32.totalorder %s23, 1
      %p107 = por %p105, %p106
      %p109 = scmp.ne.s32.totalorder %s94, %s108
      %p110 = scmp.eq.s32.totalorder %s23, 0
      %p111 = por %p109, %p110
      %s113 = sadd.s32 %s112, 1
      %p116 = scmp.eq.s32.totalorder %s17, 1
      %p117 = scmp.ne.s32.totalorder %s112, %s114
      %p118 = scmp.eq.s32.totalorder %s17, 0
      %p119 = por %p117, %p118
      %p120 = scmp.ne.s32.totalorder %s112, %s114
      %p121 = scmp.eq.s32.totalorder %s22, 1
      %p122 = por %p120, %p121
      %p123 = scmp.ne.s32.totalorder %s114, %s115
      %p124 = scmp.eq.s32.totalorder %s22, 0
      %p125 = por %p123, %p124
      %p126 = scmp.ne.s32.totalorder %s114, %s115
      %p127 = scmp.eq.s32.totalorder %s23, 1
      %p128 = por %p126, %p127
      %p130 = scmp.ne.s32.totalorder %s115, %s129
      %p131 = scmp.eq.s32.totalorder %s23, 0
      %p132 = por %p130, %p131
      %s133 = ssub.s32 %s25, %s32
      %s134 = ssub.s32 %s24, %s36
      %s135 = sor.u32 %s133, %s134
      %p136 = scmp.eq.s32.totalorder %s135, 0
      %s138 = sadd.s32 %s137, 1
      %s139 = scalar_select %p136, %s137, %s138
      %p142 = pneg %p136
      %p143 = scmp.eq.s32.totalorder %s17, 1
      %p144 = por %p142, %p143
      %p145 = scmp.ne.s32.totalorder %s137, %s140
      %p146 = scmp.eq.s32.totalorder %s17, 0
      %p147 = por %p145, %p146
      %p148 = scmp.ne.s32.totalorder %s137, %s140
      %p149 = scmp.eq.s32.totalorder %s22, 1
      %p150 = por %p148, %p149
      %p151 = scmp.ne.s32.totalorder %s140, %s141
      %p152 = scmp.eq.s32.totalorder %s22, 0
      %p153 = por %p151, %p152
      %p154 = scmp.ne.s32.totalorder %s140, %s141
      %p155 = scmp.eq.s32.totalorder %s23, 1
      %p156 = por %p154, %p155
      %p158 = scmp.ne.s32.totalorder %s141, %s157
      %p159 = scmp.eq.s32.totalorder %s23, 0
      %p160 = por %p158, %p159
      %p161 = scmp.le.s32.totalorder 1, %s17
      %p162 = scmp.lt.s32.totalorder %s17, 3
      %p163 = pnand %p161, %p162
      %p164 = pneg %p163
      // Predicated region
      $region9: #{tpu_custom_call.1} parent=5 // pred_check
        _
      $region10: #{tpu_custom_call.1} parent=5 // pred_check_branch
        %166 = sbr.rel (%p163) target = $region12
      $region11: #{tpu_custom_call.1} parent=5 // pred_region
        %s167 = ssub.s32 %s17, 1
        // Predicated region
        $region13: #{tpu_custom_call.1} parent=11 // pred_check
          %p168 = pneg %p104
        $region14: #{tpu_custom_call.1} parent=11 // pred_check_branch
          %170 = sbr.rel (%p168) target = $region16
        $region15: #{tpu_custom_call.1} parent=11 // pred_region
          %s172 = ssub.s32 128, 128
          %173 = vsyncadd [#allocation7], %s172
          %s175 = sshll.u32 [#allocation6], 4
          %s176 = int_to_ptr.vmem [resolvable:$true] %s175
          %178 = dma.hbm_to_vmem [thread:$0]  %s2, 128, %s176, [#allocation7]
        $region16: #{tpu_custom_call.1} parent=11 // pred_fallthru
          _
        // Predicated region
        $region17: #{tpu_custom_call.1} parent=11 // pred_check
          %p179 = pneg %p125
        $region18: #{tpu_custom_call.1} parent=11 // pred_check_branch
          %181 = sbr.rel (%p179) target = $region20
        $region19: #{tpu_custom_call.1} parent=11 // pred_region
          _
        $region20: #{tpu_custom_call.1} parent=11 // pred_fallthru
          _
      $region12: #{tpu_custom_call.1} parent=5 // pred_fallthru
        _
      %p182 = scmp.lt.s32.totalorder %s17, 2
      // Predicated region
      $region21: #{tpu_custom_call.1} parent=5 // pred_check
        %p183 = pneg %p182
      $region22: #{tpu_custom_call.1} parent=5 // pred_check_branch
        %185 = sbr.rel (%p183) target = $region24
      $region23: #{tpu_custom_call.1} parent=5 // pred_region
        // Predicated region
        $region25: #{tpu_custom_call.1} parent=23 // pred_check
          %p186 = pneg %p51
        $region26: #{tpu_custom_call.1} parent=23 // pred_check_branch
          %188 = sbr.rel (%p186) target = $region28
        $region27: #{tpu_custom_call.1} parent=23 // pred_region
          %s189 = sand.u32 %s41, 1
          %s190 = scalar_lea.sflag [#allocation4], %s189
          %s191 = sand.u32 %s41, 1
          %s192 = smul.addr %s191, 32
          %s193 = scalar_lea.vmem [#allocation3], %s192
          %s194 = smul.u32 4, %s24
          %s196 = ssub.s32 512, 512
          %197 = vsyncadd %s190, %s196
          %s198 = smul.addr %s25, 8
          %s199 = sadd.s32 %s194, %s198
          %s200 = smul.addr %s199, 128
          %s201 = scalar_lea.hbm %s0, %s200
          %s203 = sshll.u32 %s193, 4
          %s204 = int_to_ptr.vmem [resolvable:$true] %s203
          %206 = dma.hbm_to_vmem [thread:$0]  %s201, 512, %s204, %s190
        $region28: #{tpu_custom_call.1} parent=23 // pred_fallthru
          _
        // Predicated region
        $region29: #{tpu_custom_call.1} parent=23 // pred_check
          %p207 = pneg %p77
        $region30: #{tpu_custom_call.1} parent=23 // pred_check_branch
          %209 = sbr.rel (%p207) target = $region32
        $region31: #{tpu_custom_call.1} parent=23 // pred_region
          %s210 = smul.u32 4, %s24
          %p211 = scmp.lt.s32.totalorder %s210, 7
          %s212 = scalar_select %p211, %s210, 7
          %s213 = scalar_lea.vmem %s1, %s212
          %s214 = smul.u32 4, %s24
        $region32: #{tpu_custom_call.1} parent=23 // pred_fallthru
          _
      $region24: #{tpu_custom_call.1} parent=5 // pred_fallthru
        _
      %p215 = scmp.le.s32.totalorder 1, %s17
      %p216 = scmp.lt.s32.totalorder %s17, 3
      %p217 = pnand %p215, %p216
      %p218 = pneg %p217
      // Predicated region
      $region33: #{tpu_custom_call.1} parent=5 // pred_check
        _
      $region34: #{tpu_custom_call.1} parent=5 // pred_check_branch
        %220 = sbr.rel (%p217) target = $region36
      $region35: #{tpu_custom_call.1} parent=5 // pred_region
        %s221 = ssub.s32 %s17, 1
        %s222 = sand.u32 %s44, 1
        %s223 = scalar_lea.sflag [#allocation4], %s222
        %s224 = sand.u32 %s44, 1
        %s225 = smul.addr %s224, 32
        %s226 = scalar_lea.vmem [#allocation3], %s225
        // Predicated region
        $region37: #{tpu_custom_call.1} parent=35 // pred_check
          %p227 = pneg %p57
        $region38: #{tpu_custom_call.1} parent=35 // pred_check_branch
          %229 = sbr.rel (%p227) target = $region40
        $region39: #{tpu_custom_call.1} parent=35 // pred_region
          %230 = dma.done %s223, 512
        $region40: #{tpu_custom_call.1} parent=35 // pred_fallthru
          _
        // Predicated region
        $region41: #{tpu_custom_call.1} parent=35 // pred_check
          %p231 = pneg %p104
        $region42: #{tpu_custom_call.1} parent=35 // pred_check_branch
          %233 = sbr.rel (%p231) target = $region44
        $region43: #{tpu_custom_call.1} parent=35 // pred_region
          %234 = dma.done [#allocation7], 128
        $region44: #{tpu_custom_call.1} parent=35 // pred_fallthru
          _
        %s235 = sand.u32 %s44, 1
        %s236 = scalar_lea.sflag [#allocation4], %s235
        %s237 = sand.u32 %s44, 1
        %s238 = smul.addr %s237, 32
        %s239 = scalar_lea.vmem [#allocation3], %s238
        %p240 = pneg %p57
        %p241 = pneg %p54
        %s242 = smul.u32 4, %s26
        %p243 = scmp.lt.s32.totalorder %s242, 7
        %s244 = scalar_select %p243, %s242, 7
        %s245 = scalar_lea.vmem %s1, %s244
        %p246 = pneg %p83
        %p247 = pneg %p80
        %p248 = pneg %p104
        %p249 = pneg %p101
        %p250 = pneg %p125
        %p251 = pneg %p122
        %p252 = pneg %p153
        %p253 = pneg %p150
        %s254 = sand.u32 %s140, 1
        %s255 = scalar_lea.sflag [#allocation5], %s254
        %s256 = sand.u32 %s140, 1
        %s257 = smul.addr %s256, 32
        %s258 = scalar_lea.vmem [#allocation8], %s257
        %s259 = smul.u32 4, %s26
        %s260 = smul.u32 4, %s26
        %p261 = scmp.lt.s32.totalorder %s260, 7
        %s262 = scalar_select %p261, %s260, 7
        %s263 = scalar_lea.vmem %s1, %s262
        %s264 = smul.u32 4, %s26
        %s265 = smul.u32 4, %s26
        %p266 = scmp.eq.s32.totalorder %s27, 0
        // Predicated region
        $region45: #{tpu_custom_call.1} parent=35 // pred_check
          %p267 = pneg %p266
        $region46: #{tpu_custom_call.1} parent=35 // pred_check_branch
          %269 = sbr.rel (%p267) target = $region48
        $region47: #{tpu_custom_call.1} parent=35 // pred_region
          %v270 = vld [vmem:[%s263] sm:$0xf]
          %v271 = vlaneseq
          %vm272 = vcmp.ge.s32.totalorder %v271, 0
          %vm273 = vcmp.lt.s32.totalorder %v271, 512
          %vm274 = vmand %vm272, %vm273
          %275 = vst.msk [vmem:[#allocation2] sm:$0xf] %vm274, %v270
        $region48: #{tpu_custom_call.1} parent=35 // pred_fallthru
          _
        %v276 = vld [vmem:[%s226] sm:$0xff]
        %v277 = vld [vmem:[%s226 + $0x8] sm:$0xff]
        %v278 = vld [vmem:[%s226 + $0x10] sm:$0xff]
        %v279 = vld [vmem:[%s226 + $0x18] sm:$0xff]
        %v280 = vld [vmem:[#allocation2] sm:$0xf]
        %v281 = vld [vmem:[#allocation6] sm:$0xff]
        %v282 = vld [vmem:[%s3] sm:$0xff]
        %284 = vset.pattern.permute.xlu0 0
        %285 = vperm.xlu0 %284, %v282
        %v286 = vpop.permute.xlu0 %285
        %v289 = vlaneseq
        %v290 = vshrl.u32 %v289, 7
        %v291 = vsub.s32 0, %v290
        %v292 = vrot.slane %v280, %v291
        %v293 = vlaneseq
        %v294 = vshrl.u32 %v293, 7
        %v295 = vsub.s32 1, %v294
        %v296 = vrot.slane %v280, %v295
        %v297 = vlaneseq
        %v298 = vshrl.u32 %v297, 7
        %v299 = vsub.s32 2, %v298
        %v300 = vrot.slane %v280, %v299
        %v301 = vlaneseq
        %v302 = vshrl.u32 %v301, 7
        %v303 = vsub.s32 3, %v302
        %v304 = vrot.slane %v280, %v303
        %v309 = vmul.f32 %v286, %v292
        %v310 = vmul.f32 %v286, %v296
        %v311 = vmul.f32 %v286, %v300
        %v312 = vmul.f32 %v286, %v304
        %vm313 = vcmask 64512
        %v315 = vsel %vm313, %v281, 0
        %317 = vmatprep.subr.mxu0 0.0
        %318 = vmatpush1.msra.mxu0 0.0
        %319 = vmatprep.subr.mxu0 0.0
        %320 = vmatpush1.msra.mxu0 0.0
        %321 = vmatprep.subr.mxu0 0.0
        %322 = vmatpush1.msra.mxu0 0.0
        %323 = vmatprep.subr.mxu0 0.0
        %324 = vmatpush1.msra.mxu0 0.0
        %325 = vmatprep.subr.mxu0 0.0
        %326 = vmatpush1.msra.mxu0 0.0
        %327 = vmatprep.subr.mxu0 0.0
        %328 = vmatpush1.msra.mxu0 0.0
        %329 = vmatprep.subr.mxu0 0.0
        %330 = vmatpush1.msra.mxu0 0.0
        %331 = vmatprep.subr.mxu0 0.0
        %332 = vmatpush1.msra.mxu0 0.0
        %333 = vmatprep.subr.mxu0 0.0
        %334 = vmatpush1.msra.mxu0 0.0
        %335 = vmatprep.subr.mxu0 0.0
        %336 = vmatpush1.msra.mxu0 0.0
        %337 = vmatprep.subr.mxu0 0.0
        %338 = vmatpush1.msra.mxu0 0.0
        %339 = vmatprep.subr.mxu0 0.0
        %340 = vmatpush1.msra.mxu0 0.0
        %341 = vmatprep.subr.mxu0 0.0
        %342 = vmatpush1.msra.mxu0 0.0
        %343 = vmatprep.subr.mxu0 0.0
        %344 = vmatpush1.msra.mxu0 0.0
        %345 = vmatprep.subr.mxu0 0.0
        %346 = vmatpush1.msra.mxu0 0.0
        %v347 = vand.u32 %v277, 4294901760
        %348 = vmatprep.subr.mxu0 %v347
        %v349 = vand.u32 %v276, 4294901760
        %350 = vmatpush1.msra.mxu0 %v349
        %351 = vmatprep.subr.mxu0 0.0
        %352 = vmatpush2.msra.mxu0 0.0
        %353 = vmatprep.subr.mxu0 0.0
        %354 = vmatpush2.msra.mxu0 0.0
        %355 = vmatprep.subr.mxu0 0.0
        %356 = vmatpush2.msra.mxu0 0.0
        %357 = vmatprep.subr.mxu0 0.0
        %358 = vmatpush2.msra.mxu0 0.0
        %359 = vmatprep.subr.mxu0 0.0
        %360 = vmatpush2.msra.mxu0 0.0
        %361 = vmatprep.subr.mxu0 0.0
        %362 = vmatpush2.msra.mxu0 0.0
        %363 = vmatprep.subr.mxu0 0.0
        %364 = vmatpush2.msra.mxu0 0.0
        %365 = vmatprep.subr.mxu0 0.0
        %366 = vmatpush2.msra.mxu0 0.0
        %367 = vmatprep.subr.mxu0 0.0
        %368 = vmatpush2.msra.mxu0 0.0
        %369 = vmatprep.subr.mxu0 0.0
        %370 = vmatpush2.msra.mxu0 0.0
        %371 = vmatprep.subr.mxu0 0.0
        %372 = vmatpush2.msra.mxu0 0.0
        %373 = vmatprep.subr.mxu0 0.0
        %374 = vmatpush2.msra.mxu0 0.0
        %375 = vmatprep.subr.mxu0 0.0
        %376 = vmatpush2.msra.mxu0 0.0
        %377 = vmatprep.subr.mxu0 0.0
        %378 = vmatpush2.msra.mxu0 0.0
        %379 = vmatprep.subr.mxu0 0.0
        %380 = vmatpush2.msra.mxu0 0.0
        %381 = vmatprep.subr.mxu0 0.0
        %382 = vmatpush2.msra.mxu0 0.0
        %383 = vmatprep.mubr.f32.mxu0 0.0
        %v384 = vand.u32 %v315, 4294901760
        %v385 = vsub.f32 %v315, %v384
        %v386 = vand.u32 %v385, 4294901760
        %v387 = vsub.f32 %v385, %v386
        %v388 = vand.u32 %v387, 4294901760
        %389 = vmatmul.mubr.f32.gmra.mxu0 %v388
        %v390 = vpop.f32.mrf.mxu0
        %v391 = vadd.f32 %v309, %v390
        %v392 = vpop.f32.mrf.mxu0
        %v393 = vadd.f32 %v310, %v392
        %394 = vdwg.mxu0
        %395 = vmatprep.subr.mxu0 0.0
        %396 = vmatpush1.msra.mxu0 0.0
        %397 = vmatprep.subr.mxu0 0.0
        %398 = vmatpush1.msra.mxu0 0.0
        %399 = vmatprep.subr.mxu0 0.0
        %400 = vmatpush1.msra.mxu0 0.0
        %401 = vmatprep.subr.mxu0 0.0
        %402 = vmatpush1.msra.mxu0 0.0
        %403 = vmatprep.subr.mxu0 0.0
        %404 = vmatpush1.msra.mxu0 0.0
        %405 = vmatprep.subr.mxu0 0.0
        %406 = vmatpush1.msra.mxu0 0.0
        %407 = vmatprep.subr.mxu0 0.0
        %408 = vmatpush1.msra.mxu0 0.0
        %409 = vmatprep.subr.mxu0 0.0
        %410 = vmatpush1.msra.mxu0 0.0
        %411 = vmatprep.subr.mxu0 0.0
        %412 = vmatpush1.msra.mxu0 0.0
        %413 = vmatprep.subr.mxu0 0.0
        %414 = vmatpush1.msra.mxu0 0.0
        %415 = vmatprep.subr.mxu0 0.0
        %416 = vmatpush1.msra.mxu0 0.0
        %417 = vmatprep.subr.mxu0 0.0
        %418 = vmatpush1.msra.mxu0 0.0
        %419 = vmatprep.subr.mxu0 0.0
        %420 = vmatpush1.msra.mxu0 0.0
        %421 = vmatprep.subr.mxu0 0.0
        %422 = vmatpush1.msra.mxu0 0.0
        %423 = vmatprep.subr.mxu0 0.0
        %424 = vmatpush1.msra.mxu0 0.0
        %v425 = vand.u32 %v277, 4294901760
        %v426 = vsub.f32 %v277, %v425
        %v427 = vand.u32 %v426, 4294901760
        %v428 = vsub.f32 %v426, %v427
        %v429 = vand.u32 %v428, 4294901760
        %430 = vmatprep.subr.mxu0 %v429
        %v431 = vand.u32 %v276, 4294901760
        %v432 = vsub.f32 %v276, %v431
        %v433 = vand.u32 %v432, 4294901760
        %v434 = vsub.f32 %v432, %v433
        %v435 = vand.u32 %v434, 4294901760
        %436 = vmatpush1.msra.mxu0 %v435
        %437 = vmatprep.subr.mxu0 0.0
        %438 = vmatpush2.msra.mxu0 0.0
        %439 = vmatprep.subr.mxu0 0.0
        %440 = vmatpush2.msra.mxu0 0.0
        %441 = vmatprep.subr.mxu0 0.0
        %442 = vmatpush2.msra.mxu0 0.0
        %443 = vmatprep.subr.mxu0 0.0
        %444 = vmatpush2.msra.mxu0 0.0
        %445 = vmatprep.subr.mxu0 0.0
        %446 = vmatpush2.msra.mxu0 0.0
        %447 = vmatprep.subr.mxu0 0.0
        %448 = vmatpush2.msra.mxu0 0.0
        %449 = vmatprep.subr.mxu0 0.0
        %450 = vmatpush2.msra.mxu0 0.0
        %451 = vmatprep.subr.mxu0 0.0
        %452 = vmatpush2.msra.mxu0 0.0
        %453 = vmatprep.subr.mxu0 0.0
        %454 = vmatpush2.msra.mxu0 0.0
        %455 = vmatprep.subr.mxu0 0.0
        %456 = vmatpush2.msra.mxu0 0.0
        %457 = vmatprep.subr.mxu0 0.0
        %458 = vmatpush2.msra.mxu0 0.0
        %459 = vmatprep.subr.mxu0 0.0
        %460 = vmatpush2.msra.mxu0 0.0
        %461 = vmatprep.subr.mxu0 0.0
        %462 = vmatpush2.msra.mxu0 0.0
        %463 = vmatprep.subr.mxu0 0.0
        %464 = vmatpush2.msra.mxu0 0.0
        %465 = vmatprep.subr.mxu0 0.0
        %466 = vmatpush2.msra.mxu0 0.0
        %467 = vmatprep.subr.mxu0 0.0
        %468 = vmatpush2.msra.mxu0 0.0
        %469 = vmatprep.mubr.f32.mxu0 0.0
        %v470 = vand.u32 %v315, 4294901760
        %471 = vmatmul.mubr.f32.gmra.mxu0 %v470
        %v472 = vpop.f32.mrf.mxu0
        %v473 = vadd.f32 %v391, %v472
        %v474 = vpop.f32.mrf.mxu0
        %v475 = vadd.f32 %v393, %v474
        %476 = vdwg.mxu0
        %477 = vmatprep.subr.mxu0 0.0
        %478 = vmatpush1.msra.mxu0 0.0
        %479 = vmatprep.subr.mxu0 0.0
        %480 = vmatpush1.msra.mxu0 0.0
        %481 = vmatprep.subr.mxu0 0.0
        %482 = vmatpush1.msra.mxu0 0.0
        %483 = vmatprep.subr.mxu0 0.0
        %484 = vmatpush1.msra.mxu0 0.0
        %485 = vmatprep.subr.mxu0 0.0
        %486 = vmatpush1.msra.mxu0 0.0
        %487 = vmatprep.subr.mxu0 0.0
        %488 = vmatpush1.msra.mxu0 0.0
        %489 = vmatprep.subr.mxu0 0.0
        %490 = vmatpush1.msra.mxu0 0.0
        %491 = vmatprep.subr.mxu0 0.0
        %492 = vmatpush1.msra.mxu0 0.0
        %493 = vmatprep.subr.mxu0 0.0
        %494 = vmatpush1.msra.mxu0 0.0
        %495 = vmatprep.subr.mxu0 0.0
        %496 = vmatpush1.msra.mxu0 0.0
        %497 = vmatprep.subr.mxu0 0.0
        %498 = vmatpush1.msra.mxu0 0.0
        %499 = vmatprep.subr.mxu0 0.0
        %500 = vmatpush1.msra.mxu0 0.0
        %501 = vmatprep.subr.mxu0 0.0
        %502 = vmatpush1.msra.mxu0 0.0
        %503 = vmatprep.subr.mxu0 0.0
        %504 = vmatpush1.msra.mxu0 0.0
        %505 = vmatprep.subr.mxu0 0.0
        %506 = vmatpush1.msra.mxu0 0.0
        %v507 = vand.u32 %v277, 4294901760
        %v508 = vsub.f32 %v277, %v507
        %509 = vmatprep.subr.mxu0 %v508
        %v510 = vand.u32 %v276, 4294901760
        %v511 = vsub.f32 %v276, %v510
        %512 = vmatpush1.msra.mxu0 %v511
        %513 = vmatprep.subr.mxu0 0.0
        %514 = vmatpush2.msra.mxu0 0.0
        %515 = vmatprep.subr.mxu0 0.0
        %516 = vmatpush2.msra.mxu0 0.0
        %517 = vmatprep.subr.mxu0 0.0
        %518 = vmatpush2.msra.mxu0 0.0
        %519 = vmatprep.subr.mxu0 0.0
        %520 = vmatpush2.msra.mxu0 0.0
        %521 = vmatprep.subr.mxu0 0.0
        %522 = vmatpush2.msra.mxu0 0.0
        %523 = vmatprep.subr.mxu0 0.0
        %524 = vmatpush2.msra.mxu0 0.0
        %525 = vmatprep.subr.mxu0 0.0
        %526 = vmatpush2.msra.mxu0 0.0
        %527 = vmatprep.subr.mxu0 0.0
        %528 = vmatpush2.msra.mxu0 0.0
        %529 = vmatprep.subr.mxu0 0.0
        %530 = vmatpush2.msra.mxu0 0.0
        %531 = vmatprep.subr.mxu0 0.0
        %532 = vmatpush2.msra.mxu0 0.0
        %533 = vmatprep.subr.mxu0 0.0
        %534 = vmatpush2.msra.mxu0 0.0
        %535 = vmatprep.subr.mxu0 0.0
        %536 = vmatpush2.msra.mxu0 0.0
        %537 = vmatprep.subr.mxu0 0.0
        %538 = vmatpush2.msra.mxu0 0.0
        %539 = vmatprep.subr.mxu0 0.0
        %540 = vmatpush2.msra.mxu0 0.0
        %541 = vmatprep.subr.mxu0 0.0
        %542 = vmatpush2.msra.mxu0 0.0
        %543 = vmatprep.subr.mxu0 0.0
        %544 = vmatpush2.msra.mxu0 0.0
        %545 = vmatprep.mubr.f32.mxu0 0.0
        %v546 = vand.u32 %v315, 4294901760
        %v547 = vsub.f32 %v315, %v546
        %548 = vmatmul.mubr.f32.gmra.mxu0 %v547
        %v549 = vpop.f32.mrf.mxu0
        %v550 = vadd.f32 %v473, %v549
        %v551 = vpop.f32.mrf.mxu0
        %v552 = vadd.f32 %v475, %v551
        %553 = vdwg.mxu0
        %554 = vmatprep.subr.mxu0 0.0
        %555 = vmatpush1.msra.mxu0 0.0
        %556 = vmatprep.subr.mxu0 0.0
        %557 = vmatpush1.msra.mxu0 0.0
        %558 = vmatprep.subr.mxu0 0.0
        %559 = vmatpush1.msra.mxu0 0.0
        %560 = vmatprep.subr.mxu0 0.0
        %561 = vmatpush1.msra.mxu0 0.0
        %562 = vmatprep.subr.mxu0 0.0
        %563 = vmatpush1.msra.mxu0 0.0
        %564 = vmatprep.subr.mxu0 0.0
        %565 = vmatpush1.msra.mxu0 0.0
        %566 = vmatprep.subr.mxu0 0.0
        %567 = vmatpush1.msra.mxu0 0.0
        %568 = vmatprep.subr.mxu0 0.0
        %569 = vmatpush1.msra.mxu0 0.0
        %570 = vmatprep.subr.mxu0 0.0
        %571 = vmatpush1.msra.mxu0 0.0
        %572 = vmatprep.subr.mxu0 0.0
        %573 = vmatpush1.msra.mxu0 0.0
        %574 = vmatprep.subr.mxu0 0.0
        %575 = vmatpush1.msra.mxu0 0.0
        %576 = vmatprep.subr.mxu0 0.0
        %577 = vmatpush1.msra.mxu0 0.0
        %578 = vmatprep.subr.mxu0 0.0
        %579 = vmatpush1.msra.mxu0 0.0
        %580 = vmatprep.subr.mxu0 0.0
        %581 = vmatpush1.msra.mxu0 0.0
        %582 = vmatprep.subr.mxu0 0.0
        %583 = vmatpush1.msra.mxu0 0.0
        %v584 = vand.u32 %v277, 4294901760
        %585 = vmatprep.subr.mxu0 %v584
        %v586 = vand.u32 %v276, 4294901760
        %587 = vmatpush1.msra.mxu0 %v586
        %588 = vmatprep.subr.mxu0 0.0
        %589 = vmatpush2.msra.mxu0 0.0
        %590 = vmatprep.subr.mxu0 0.0
        %591 = vmatpush2.msra.mxu0 0.0
        %592 = vmatprep.subr.mxu0 0.0
        %593 = vmatpush2.msra.mxu0 0.0
        %594 = vmatprep.subr.mxu0 0.0
        %595 = vmatpush2.msra.mxu0 0.0
        %596 = vmatprep.subr.mxu0 0.0
        %597 = vmatpush2.msra.mxu0 0.0
        %598 = vmatprep.subr.mxu0 0.0
        %599 = vmatpush2.msra.mxu0 0.0
        %600 = vmatprep.subr.mxu0 0.0
        %601 = vmatpush2.msra.mxu0 0.0
        %602 = vmatprep.subr.mxu0 0.0
        %603 = vmatpush2.msra.mxu0 0.0
        %604 = vmatprep.subr.mxu0 0.0
        %605 = vmatpush2.msra.mxu0 0.0
        %606 = vmatprep.subr.mxu0 0.0
        %607 = vmatpush2.msra.mxu0 0.0
        %608 = vmatprep.subr.mxu0 0.0
        %609 = vmatpush2.msra.mxu0 0.0
        %610 = vmatprep.subr.mxu0 0.0
        %611 = vmatpush2.msra.mxu0 0.0
        %612 = vmatprep.subr.mxu0 0.0
        %613 = vmatpush2.msra.mxu0 0.0
        %614 = vmatprep.subr.mxu0 0.0
        %615 = vmatpush2.msra.mxu0 0.0
        %616 = vmatprep.subr.mxu0 0.0
        %617 = vmatpush2.msra.mxu0 0.0
        %618 = vmatprep.subr.mxu0 0.0
        %619 = vmatpush2.msra.mxu0 0.0
        %620 = vmatprep.mubr.f32.mxu0 0.0
        %v621 = vand.u32 %v315, 4294901760
        %v622 = vsub.f32 %v315, %v621
        %v623 = vand.u32 %v622, 4294901760
        %624 = vmatmul.mubr.f32.gmra.mxu0 %v623
        %v625 = vpop.f32.mrf.mxu0
        %v626 = vadd.f32 %v550, %v625
        %v627 = vpop.f32.mrf.mxu0
        %v628 = vadd.f32 %v552, %v627
        %629 = vdwg.mxu0
        %630 = vmatprep.subr.mxu0 0.0
        %631 = vmatpush1.msra.mxu0 0.0
        %632 = vmatprep.subr.mxu0 0.0
        %633 = vmatpush1.msra.mxu0 0.0
        %634 = vmatprep.subr.mxu0 0.0
        %635 = vmatpush1.msra.mxu0 0.0
        %636 = vmatprep.subr.mxu0 0.0
        %637 = vmatpush1.msra.mxu0 0.0
        %638 = vmatprep.subr.mxu0 0.0
        %639 = vmatpush1.msra.mxu0 0.0
        %640 = vmatprep.subr.mxu0 0.0
        %641 = vmatpush1.msra.mxu0 0.0
        %642 = vmatprep.subr.mxu0 0.0
        %643 = vmatpush1.msra.mxu0 0.0
        %644 = vmatprep.subr.mxu0 0.0
        %645 = vmatpush1.msra.mxu0 0.0
        %646 = vmatprep.subr.mxu0 0.0
        %647 = vmatpush1.msra.mxu0 0.0
        %648 = vmatprep.subr.mxu0 0.0
        %649 = vmatpush1.msra.mxu0 0.0
        %650 = vmatprep.subr.mxu0 0.0
        %651 = vmatpush1.msra.mxu0 0.0
        %652 = vmatprep.subr.mxu0 0.0
        %653 = vmatpush1.msra.mxu0 0.0
        %654 = vmatprep.subr.mxu0 0.0
        %655 = vmatpush1.msra.mxu0 0.0
        %656 = vmatprep.subr.mxu0 0.0
        %657 = vmatpush1.msra.mxu0 0.0
        %658 = vmatprep.subr.mxu0 0.0
        %659 = vmatpush1.msra.mxu0 0.0
        %v660 = vand.u32 %v277, 4294901760
        %v661 = vsub.f32 %v277, %v660
        %v662 = vand.u32 %v661, 4294901760
        %663 = vmatprep.subr.mxu0 %v662
        %v664 = vand.u32 %v276, 4294901760
        %v665 = vsub.f32 %v276, %v664
        %v666 = vand.u32 %v665, 4294901760
        %667 = vmatpush1.msra.mxu0 %v666
        %668 = vmatprep.subr.mxu0 0.0
        %669 = vmatpush2.msra.mxu0 0.0
        %670 = vmatprep.subr.mxu0 0.0
        %671 = vmatpush2.msra.mxu0 0.0
        %672 = vmatprep.subr.mxu0 0.0
        %673 = vmatpush2.msra.mxu0 0.0
        %674 = vmatprep.subr.mxu0 0.0
        %675 = vmatpush2.msra.mxu0 0.0
        %676 = vmatprep.subr.mxu0 0.0
        %677 = vmatpush2.msra.mxu0 0.0
        %678 = vmatprep.subr.mxu0 0.0
        %679 = vmatpush2.msra.mxu0 0.0
        %680 = vmatprep.subr.mxu0 0.0
        %681 = vmatpush2.msra.mxu0 0.0
        %682 = vmatprep.subr.mxu0 0.0
        %683 = vmatpush2.msra.mxu0 0.0
        %684 = vmatprep.subr.mxu0 0.0
        %685 = vmatpush2.msra.mxu0 0.0
        %686 = vmatprep.subr.mxu0 0.0
        %687 = vmatpush2.msra.mxu0 0.0
        %688 = vmatprep.subr.mxu0 0.0
        %689 = vmatpush2.msra.mxu0 0.0
        %690 = vmatprep.subr.mxu0 0.0
        %691 = vmatpush2.msra.mxu0 0.0
        %692 = vmatprep.subr.mxu0 0.0
        %693 = vmatpush2.msra.mxu0 0.0
        %694 = vmatprep.subr.mxu0 0.0
        %695 = vmatpush2.msra.mxu0 0.0
        %696 = vmatprep.subr.mxu0 0.0
        %697 = vmatpush2.msra.mxu0 0.0
        %698 = vmatprep.subr.mxu0 0.0
        %699 = vmatpush2.msra.mxu0 0.0
        %700 = vmatprep.mubr.f32.mxu0 0.0
        %v701 = vand.u32 %v315, 4294901760
        %702 = vmatmul.mubr.f32.gmra.mxu0 %v701
        %v703 = vpop.f32.mrf.mxu0
        %v704 = vadd.f32 %v626, %v703
        %v705 = vpop.f32.mrf.mxu0
        %v706 = vadd.f32 %v628, %v705
        %707 = vdwg.mxu0
        %708 = vmatprep.subr.mxu0 0.0
        %709 = vmatpush1.msra.mxu0 0.0
        %710 = vmatprep.subr.mxu0 0.0
        %711 = vmatpush1.msra.mxu0 0.0
        %712 = vmatprep.subr.mxu0 0.0
        %713 = vmatpush1.msra.mxu0 0.0
        %714 = vmatprep.subr.mxu0 0.0
        %715 = vmatpush1.msra.mxu0 0.0
        %716 = vmatprep.subr.mxu0 0.0
        %717 = vmatpush1.msra.mxu0 0.0
        %718 = vmatprep.subr.mxu0 0.0
        %719 = vmatpush1.msra.mxu0 0.0
        %720 = vmatprep.subr.mxu0 0.0
        %721 = vmatpush1.msra.mxu0 0.0
        %722 = vmatprep.subr.mxu0 0.0
        %723 = vmatpush1.msra.mxu0 0.0
        %724 = vmatprep.subr.mxu0 0.0
        %725 = vmatpush1.msra.mxu0 0.0
        %726 = vmatprep.subr.mxu0 0.0
        %727 = vmatpush1.msra.mxu0 0.0
        %728 = vmatprep.subr.mxu0 0.0
        %729 = vmatpush1.msra.mxu0 0.0
        %730 = vmatprep.subr.mxu0 0.0
        %731 = vmatpush1.msra.mxu0 0.0
        %732 = vmatprep.subr.mxu0 0.0
        %733 = vmatpush1.msra.mxu0 0.0
        %734 = vmatprep.subr.mxu0 0.0
        %735 = vmatpush1.msra.mxu0 0.0
        %736 = vmatprep.subr.mxu0 0.0
        %737 = vmatpush1.msra.mxu0 0.0
        %v738 = vand.u32 %v277, 4294901760
        %739 = vmatprep.subr.mxu0 %v738
        %v740 = vand.u32 %v276, 4294901760
        %741 = vmatpush1.msra.mxu0 %v740
        %742 = vmatprep.subr.mxu0 0.0
        %743 = vmatpush2.msra.mxu0 0.0
        %744 = vmatprep.subr.mxu0 0.0
        %745 = vmatpush2.msra.mxu0 0.0
        %746 = vmatprep.subr.mxu0 0.0
        %747 = vmatpush2.msra.mxu0 0.0
        %748 = vmatprep.subr.mxu0 0.0
        %749 = vmatpush2.msra.mxu0 0.0
        %750 = vmatprep.subr.mxu0 0.0
        %751 = vmatpush2.msra.mxu0 0.0
        %752 = vmatprep.subr.mxu0 0.0
        %753 = vmatpush2.msra.mxu0 0.0
        %754 = vmatprep.subr.mxu0 0.0
        %755 = vmatpush2.msra.mxu0 0.0
        %756 = vmatprep.subr.mxu0 0.0
        %757 = vmatpush2.msra.mxu0 0.0
        %758 = vmatprep.subr.mxu0 0.0
        %759 = vmatpush2.msra.mxu0 0.0
        %760 = vmatprep.subr.mxu0 0.0
        %761 = vmatpush2.msra.mxu0 0.0
        %762 = vmatprep.subr.mxu0 0.0
        %763 = vmatpush2.msra.mxu0 0.0
        %764 = vmatprep.subr.mxu0 0.0
        %765 = vmatpush2.msra.mxu0 0.0
        %766 = vmatprep.subr.mxu0 0.0
        %767 = vmatpush2.msra.mxu0 0.0
        %768 = vmatprep.subr.mxu0 0.0
        %769 = vmatpush2.msra.mxu0 0.0
        %770 = vmatprep.subr.mxu0 0.0
        %771 = vmatpush2.msra.mxu0 0.0
        %772 = vmatprep.subr.mxu0 0.0
        %773 = vmatpush2.msra.mxu0 0.0
        %774 = vmatprep.mubr.f32.mxu0 0.0
        %v775 = vand.u32 %v315, 4294901760
        %776 = vmatmul.mubr.f32.gmra.mxu0 %v775
        %v777 = vpop.f32.mrf.mxu0
        %v778 = vadd.f32 %v704, %v777
        %v779 = vpop.f32.mrf.mxu0
        %v780 = vadd.f32 %v706, %v779
        %781 = vdwg.mxu0
        %782 = vmatprep.subr.mxu0 0.0
        %783 = vmatpush1.msra.mxu0 0.0
        %784 = vmatprep.subr.mxu0 0.0
        %785 = vmatpush1.msra.mxu0 0.0
        %786 = vmatprep.subr.mxu0 0.0
        %787 = vmatpush1.msra.mxu0 0.0
        %788 = vmatprep.subr.mxu0 0.0
        %789 = vmatpush1.msra.mxu0 0.0
        %790 = vmatprep.subr.mxu0 0.0
        %791 = vmatpush1.msra.mxu0 0.0
        %792 = vmatprep.subr.mxu0 0.0
        %793 = vmatpush1.msra.mxu0 0.0
        %794 = vmatprep.subr.mxu0 0.0
        %795 = vmatpush1.msra.mxu0 0.0
        %796 = vmatprep.subr.mxu0 0.0
        %797 = vmatpush1.msra.mxu0 0.0
        %798 = vmatprep.subr.mxu0 0.0
        %799 = vmatpush1.msra.mxu0 0.0
        %800 = vmatprep.subr.mxu0 0.0
        %801 = vmatpush1.msra.mxu0 0.0
        %802 = vmatprep.subr.mxu0 0.0
        %803 = vmatpush1.msra.mxu0 0.0
        %804 = vmatprep.subr.mxu0 0.0
        %805 = vmatpush1.msra.mxu0 0.0
        %806 = vmatprep.subr.mxu0 0.0
        %807 = vmatpush1.msra.mxu0 0.0
        %808 = vmatprep.subr.mxu0 0.0
        %809 = vmatpush1.msra.mxu0 0.0
        %810 = vmatprep.subr.mxu0 0.0
        %811 = vmatpush1.msra.mxu0 0.0
        %v812 = vand.u32 %v279, 4294901760
        %813 = vmatprep.subr.mxu0 %v812
        %v814 = vand.u32 %v278, 4294901760
        %815 = vmatpush1.msra.mxu0 %v814
        %816 = vmatprep.subr.mxu0 0.0
        %817 = vmatpush2.msra.mxu0 0.0
        %818 = vmatprep.subr.mxu0 0.0
        %819 = vmatpush2.msra.mxu0 0.0
        %820 = vmatprep.subr.mxu0 0.0
        %821 = vmatpush2.msra.mxu0 0.0
        %822 = vmatprep.subr.mxu0 0.0
        %823 = vmatpush2.msra.mxu0 0.0
        %824 = vmatprep.subr.mxu0 0.0
        %825 = vmatpush2.msra.mxu0 0.0
        %826 = vmatprep.subr.mxu0 0.0
        %827 = vmatpush2.msra.mxu0 0.0
        %828 = vmatprep.subr.mxu0 0.0
        %829 = vmatpush2.msra.mxu0 0.0
        %830 = vmatprep.subr.mxu0 0.0
        %831 = vmatpush2.msra.mxu0 0.0
        %832 = vmatprep.subr.mxu0 0.0
        %833 = vmatpush2.msra.mxu0 0.0
        %834 = vmatprep.subr.mxu0 0.0
        %835 = vmatpush2.msra.mxu0 0.0
        %836 = vmatprep.subr.mxu0 0.0
        %837 = vmatpush2.msra.mxu0 0.0
        %838 = vmatprep.subr.mxu0 0.0
        %839 = vmatpush2.msra.mxu0 0.0
        %840 = vmatprep.subr.mxu0 0.0
        %841 = vmatpush2.msra.mxu0 0.0
        %842 = vmatprep.subr.mxu0 0.0
        %843 = vmatpush2.msra.mxu0 0.0
        %844 = vmatprep.subr.mxu0 0.0
        %845 = vmatpush2.msra.mxu0 0.0
        %846 = vmatprep.subr.mxu0 0.0
        %847 = vmatpush2.msra.mxu0 0.0
        %848 = vmatprep.mubr.f32.mxu0 0.0
        %v849 = vand.u32 %v315, 4294901760
        %v850 = vsub.f32 %v315, %v849
        %v851 = vand.u32 %v850, 4294901760
        %v852 = vsub.f32 %v850, %v851
        %v853 = vand.u32 %v852, 4294901760
        %854 = vmatmul.mubr.f32.gmra.mxu0 %v853
        %v855 = vpop.f32.mrf.mxu0
        %v856 = vadd.f32 %v311, %v855
        %v857 = vpop.f32.mrf.mxu0
        %v858 = vadd.f32 %v312, %v857
        %859 = vdwg.mxu0
        %860 = vmatprep.subr.mxu0 0.0
        %861 = vmatpush1.msra.mxu0 0.0
        %862 = vmatprep.subr.mxu0 0.0
        %863 = vmatpush1.msra.mxu0 0.0
        %864 = vmatprep.subr.mxu0 0.0
        %865 = vmatpush1.msra.mxu0 0.0
        %866 = vmatprep.subr.mxu0 0.0
        %867 = vmatpush1.msra.mxu0 0.0
        %868 = vmatprep.subr.mxu0 0.0
        %869 = vmatpush1.msra.mxu0 0.0
        %870 = vmatprep.subr.mxu0 0.0
        %871 = vmatpush1.msra.mxu0 0.0
        %872 = vmatprep.subr.mxu0 0.0
        %873 = vmatpush1.msra.mxu0 0.0
        %874 = vmatprep.subr.mxu0 0.0
        %875 = vmatpush1.msra.mxu0 0.0
        %876 = vmatprep.subr.mxu0 0.0
        %877 = vmatpush1.msra.mxu0 0.0
        %878 = vmatprep.subr.mxu0 0.0
        %879 = vmatpush1.msra.mxu0 0.0
        %880 = vmatprep.subr.mxu0 0.0
        %881 = vmatpush1.msra.mxu0 0.0
        %882 = vmatprep.subr.mxu0 0.0
        %883 = vmatpush1.msra.mxu0 0.0
        %884 = vmatprep.subr.mxu0 0.0
        %885 = vmatpush1.msra.mxu0 0.0
        %886 = vmatprep.subr.mxu0 0.0
        %887 = vmatpush1.msra.mxu0 0.0
        %888 = vmatprep.subr.mxu0 0.0
        %889 = vmatpush1.msra.mxu0 0.0
        %v890 = vand.u32 %v279, 4294901760
        %v891 = vsub.f32 %v279, %v890
        %v892 = vand.u32 %v891, 4294901760
        %v893 = vsub.f32 %v891, %v892
        %v894 = vand.u32 %v893, 4294901760
        %895 = vmatprep.subr.mxu0 %v894
        %v896 = vand.u32 %v278, 4294901760
        %v897 = vsub.f32 %v278, %v896
        %v898 = vand.u32 %v897, 4294901760
        %v899 = vsub.f32 %v897, %v898
        %v900 = vand.u32 %v899, 4294901760
        %901 = vmatpush1.msra.mxu0 %v900
        %902 = vmatprep.subr.mxu0 0.0
        %903 = vmatpush2.msra.mxu0 0.0
        %904 = vmatprep.subr.mxu0 0.0
        %905 = vmatpush2.msra.mxu0 0.0
        %906 = vmatprep.subr.mxu0 0.0
        %907 = vmatpush2.msra.mxu0 0.0
        %908 = vmatprep.subr.mxu0 0.0
        %909 = vmatpush2.msra.mxu0 0.0
        %910 = vmatprep.subr.mxu0 0.0
        %911 = vmatpush2.msra.mxu0 0.0
        %912 = vmatprep.subr.mxu0 0.0
        %913 = vmatpush2.msra.mxu0 0.0
        %914 = vmatprep.subr.mxu0 0.0
        %915 = vmatpush2.msra.mxu0 0.0
        %916 = vmatprep.subr.mxu0 0.0
        %917 = vmatpush2.msra.mxu0 0.0
        %918 = vmatprep.subr.mxu0 0.0
        %919 = vmatpush2.msra.mxu0 0.0
        %920 = vmatprep.subr.mxu0 0.0
        %921 = vmatpush2.msra.mxu0 0.0
        %922 = vmatprep.subr.mxu0 0.0
        %923 = vmatpush2.msra.mxu0 0.0
        %924 = vmatprep.subr.mxu0 0.0
        %925 = vmatpush2.msra.mxu0 0.0
        %926 = vmatprep.subr.mxu0 0.0
        %927 = vmatpush2.msra.mxu0 0.0
        %928 = vmatprep.subr.mxu0 0.0
        %929 = vmatpush2.msra.mxu0 0.0
        %930 = vmatprep.subr.mxu0 0.0
        %931 = vmatpush2.msra.mxu0 0.0
        %932 = vmatprep.subr.mxu0 0.0
        %933 = vmatpush2.msra.mxu0 0.0
        %934 = vmatprep.mubr.f32.mxu0 0.0
        %v935 = vand.u32 %v315, 4294901760
        %936 = vmatmul.mubr.f32.gmra.mxu0 %v935
        %v937 = vpop.f32.mrf.mxu0
        %v938 = vadd.f32 %v856, %v937
        %v939 = vpop.f32.mrf.mxu0
        %v940 = vadd.f32 %v858, %v939
        %941 = vdwg.mxu0
        %942 = vmatprep.subr.mxu0 0.0
        %943 = vmatpush1.msra.mxu0 0.0
        %944 = vmatprep.subr.mxu0 0.0
        %945 = vmatpush1.msra.mxu0 0.0
        %946 = vmatprep.subr.mxu0 0.0
        %947 = vmatpush1.msra.mxu0 0.0
        %948 = vmatprep.subr.mxu0 0.0
        %949 = vmatpush1.msra.mxu0 0.0
        %950 = vmatprep.subr.mxu0 0.0
        %951 = vmatpush1.msra.mxu0 0.0
        %952 = vmatprep.subr.mxu0 0.0
        %953 = vmatpush1.msra.mxu0 0.0
        %954 = vmatprep.subr.mxu0 0.0
        %955 = vmatpush1.msra.mxu0 0.0
        %956 = vmatprep.subr.mxu0 0.0
        %957 = vmatpush1.msra.mxu0 0.0
        %958 = vmatprep.subr.mxu0 0.0
        %959 = vmatpush1.msra.mxu0 0.0
        %960 = vmatprep.subr.mxu0 0.0
        %961 = vmatpush1.msra.mxu0 0.0
        %962 = vmatprep.subr.mxu0 0.0
        %963 = vmatpush1.msra.mxu0 0.0
        %964 = vmatprep.subr.mxu0 0.0
        %965 = vmatpush1.msra.mxu0 0.0
        %966 = vmatprep.subr.mxu0 0.0
        %967 = vmatpush1.msra.mxu0 0.0
        %968 = vmatprep.subr.mxu0 0.0
        %969 = vmatpush1.msra.mxu0 0.0
        %970 = vmatprep.subr.mxu0 0.0
        %971 = vmatpush1.msra.mxu0 0.0
        %v972 = vand.u32 %v279, 4294901760
        %v973 = vsub.f32 %v279, %v972
        %974 = vmatprep.subr.mxu0 %v973
        %v975 = vand.u32 %v278, 4294901760
        %v976 = vsub.f32 %v278, %v975
        %977 = vmatpush1.msra.mxu0 %v976
        %978 = vmatprep.subr.mxu0 0.0
        %979 = vmatpush2.msra.mxu0 0.0
        %980 = vmatprep.subr.mxu0 0.0
        %981 = vmatpush2.msra.mxu0 0.0
        %982 = vmatprep.subr.mxu0 0.0
        %983 = vmatpush2.msra.mxu0 0.0
        %984 = vmatprep.subr.mxu0 0.0
        %985 = vmatpush2.msra.mxu0 0.0
        %986 = vmatprep.subr.mxu0 0.0
        %987 = vmatpush2.msra.mxu0 0.0
        %988 = vmatprep.subr.mxu0 0.0
        %989 = vmatpush2.msra.mxu0 0.0
        %990 = vmatprep.subr.mxu0 0.0
        %991 = vmatpush2.msra.mxu0 0.0
        %992 = vmatprep.subr.mxu0 0.0
        %993 = vmatpush2.msra.mxu0 0.0
        %994 = vmatprep.subr.mxu0 0.0
        %995 = vmatpush2.msra.mxu0 0.0
        %996 = vmatprep.subr.mxu0 0.0
        %997 = vmatpush2.msra.mxu0 0.0
        %998 = vmatprep.subr.mxu0 0.0
        %999 = vmatpush2.msra.mxu0 0.0
        %1000 = vmatprep.subr.mxu0 0.0
        %1001 = vmatpush2.msra.mxu0 0.0
        %1002 = vmatprep.subr.mxu0 0.0
        %1003 = vmatpush2.msra.mxu0 0.0
        %1004 = vmatprep.subr.mxu0 0.0
        %1005 = vmatpush2.msra.mxu0 0.0
        %1006 = vmatprep.subr.mxu0 0.0
        %1007 = vmatpush2.msra.mxu0 0.0
        %1008 = vmatprep.subr.mxu0 0.0
        %1009 = vmatpush2.msra.mxu0 0.0
        %1010 = vmatprep.mubr.f32.mxu0 0.0
        %v1011 = vand.u32 %v315, 4294901760
        %v1012 = vsub.f32 %v315, %v1011
        %1013 = vmatmul.mubr.f32.gmra.mxu0 %v1012
        %v1014 = vpop.f32.mrf.mxu0
        %v1015 = vadd.f32 %v938, %v1014
        %v1016 = vpop.f32.mrf.mxu0
        %v1017 = vadd.f32 %v940, %v1016
        %1018 = vdwg.mxu0
        %1019 = vmatprep.subr.mxu0 0.0
        %1020 = vmatpush1.msra.mxu0 0.0
        %1021 = vmatprep.subr.mxu0 0.0
        %1022 = vmatpush1.msra.mxu0 0.0
        %1023 = vmatprep.subr.mxu0 0.0
        %1024 = vmatpush1.msra.mxu0 0.0
        %1025 = vmatprep.subr.mxu0 0.0
        %1026 = vmatpush1.msra.mxu0 0.0
        %1027 = vmatprep.subr.mxu0 0.0
        %1028 = vmatpush1.msra.mxu0 0.0
        %1029 = vmatprep.subr.mxu0 0.0
        %1030 = vmatpush1.msra.mxu0 0.0
        %1031 = vmatprep.subr.mxu0 0.0
        %1032 = vmatpush1.msra.mxu0 0.0
        %1033 = vmatprep.subr.mxu0 0.0
        %1034 = vmatpush1.msra.mxu0 0.0
        %1035 = vmatprep.subr.mxu0 0.0
        %1036 = vmatpush1.msra.mxu0 0.0
        %1037 = vmatprep.subr.mxu0 0.0
        %1038 = vmatpush1.msra.mxu0 0.0
        %1039 = vmatprep.subr.mxu0 0.0
        %1040 = vmatpush1.msra.mxu0 0.0
        %1041 = vmatprep.subr.mxu0 0.0
        %1042 = vmatpush1.msra.mxu0 0.0
        %1043 = vmatprep.subr.mxu0 0.0
        %1044 = vmatpush1.msra.mxu0 0.0
        %1045 = vmatprep.subr.mxu0 0.0
        %1046 = vmatpush1.msra.mxu0 0.0
        %1047 = vmatprep.subr.mxu0 0.0
        %1048 = vmatpush1.msra.mxu0 0.0
        %v1049 = vand.u32 %v279, 4294901760
        %1050 = vmatprep.subr.mxu0 %v1049
        %v1051 = vand.u32 %v278, 4294901760
        %1052 = vmatpush1.msra.mxu0 %v1051
        %1053 = vmatprep.subr.mxu0 0.0
        %1054 = vmatpush2.msra.mxu0 0.0
        %1055 = vmatprep.subr.mxu0 0.0
        %1056 = vmatpush2.msra.mxu0 0.0
        %1057 = vmatprep.subr.mxu0 0.0
        %1058 = vmatpush2.msra.mxu0 0.0
        %1059 = vmatprep.subr.mxu0 0.0
        %1060 = vmatpush2.msra.mxu0 0.0
        %1061 = vmatprep.subr.mxu0 0.0
        %1062 = vmatpush2.msra.mxu0 0.0
        %1063 = vmatprep.subr.mxu0 0.0
        %1064 = vmatpush2.msra.mxu0 0.0
        %1065 = vmatprep.subr.mxu0 0.0
        %1066 = vmatpush2.msra.mxu0 0.0
        %1067 = vmatprep.subr.mxu0 0.0
        %1068 = vmatpush2.msra.mxu0 0.0
        %1069 = vmatprep.subr.mxu0 0.0
        %1070 = vmatpush2.msra.mxu0 0.0
        %1071 = vmatprep.subr.mxu0 0.0
        %1072 = vmatpush2.msra.mxu0 0.0
        %1073 = vmatprep.subr.mxu0 0.0
        %1074 = vmatpush2.msra.mxu0 0.0
        %1075 = vmatprep.subr.mxu0 0.0
        %1076 = vmatpush2.msra.mxu0 0.0
        %1077 = vmatprep.subr.mxu0 0.0
        %1078 = vmatpush2.msra.mxu0 0.0
        %1079 = vmatprep.subr.mxu0 0.0
        %1080 = vmatpush2.msra.mxu0 0.0
        %1081 = vmatprep.subr.mxu0 0.0
        %1082 = vmatpush2.msra.mxu0 0.0
        %1083 = vmatprep.subr.mxu0 0.0
        %1084 = vmatpush2.msra.mxu0 0.0
        %1085 = vmatprep.mubr.f32.mxu0 0.0
        %v1086 = vand.u32 %v315, 4294901760
        %v1087 = vsub.f32 %v315, %v1086
        %v1088 = vand.u32 %v1087, 4294901760
        %1089 = vmatmul.mubr.f32.gmra.mxu0 %v1088
        %v1090 = vpop.f32.mrf.mxu0
        %v1091 = vadd.f32 %v1015, %v1090
        %v1092 = vpop.f32.mrf.mxu0
        %v1093 = vadd.f32 %v1017, %v1092
        %1094 = vdwg.mxu0
        %1095 = vmatprep.subr.mxu0 0.0
        %1096 = vmatpush1.msra.mxu0 0.0
        %1097 = vmatprep.subr.mxu0 0.0
        %1098 = vmatpush1.msra.mxu0 0.0
        %1099 = vmatprep.subr.mxu0 0.0
        %1100 = vmatpush1.msra.mxu0 0.0
        %1101 = vmatprep.subr.mxu0 0.0
        %1102 = vmatpush1.msra.mxu0 0.0
        %1103 = vmatprep.subr.mxu0 0.0
        %1104 = vmatpush1.msra.mxu0 0.0
        %1105 = vmatprep.subr.mxu0 0.0
        %1106 = vmatpush1.msra.mxu0 0.0
        %1107 = vmatprep.subr.mxu0 0.0
        %1108 = vmatpush1.msra.mxu0 0.0
        %1109 = vmatprep.subr.mxu0 0.0
        %1110 = vmatpush1.msra.mxu0 0.0
        %1111 = vmatprep.subr.mxu0 0.0
        %1112 = vmatpush1.msra.mxu0 0.0
        %1113 = vmatprep.subr.mxu0 0.0
        %1114 = vmatpush1.msra.mxu0 0.0
        %1115 = vmatprep.subr.mxu0 0.0
        %1116 = vmatpush1.msra.mxu0 0.0
        %1117 = vmatprep.subr.mxu0 0.0
        %1118 = vmatpush1.msra.mxu0 0.0
        %1119 = vmatprep.subr.mxu0 0.0
        %1120 = vmatpush1.msra.mxu0 0.0
        %1121 = vmatprep.subr.mxu0 0.0
        %1122 = vmatpush1.msra.mxu0 0.0
        %1123 = vmatprep.subr.mxu0 0.0
        %1124 = vmatpush1.msra.mxu0 0.0
        %v1125 = vand.u32 %v279, 4294901760
        %v1126 = vsub.f32 %v279, %v1125
        %v1127 = vand.u32 %v1126, 4294901760
        %1128 = vmatprep.subr.mxu0 %v1127
        %v1129 = vand.u32 %v278, 4294901760
        %v1130 = vsub.f32 %v278, %v1129
        %v1131 = vand.u32 %v1130, 4294901760
        %1132 = vmatpush1.msra.mxu0 %v1131
        %1133 = vmatprep.subr.mxu0 0.0
        %1134 = vmatpush2.msra.mxu0 0.0
        %1135 = vmatprep.subr.mxu0 0.0
        %1136 = vmatpush2.msra.mxu0 0.0
        %1137 = vmatprep.subr.mxu0 0.0
        %1138 = vmatpush2.msra.mxu0 0.0
        %1139 = vmatprep.subr.mxu0 0.0
        %1140 = vmatpush2.msra.mxu0 0.0
        %1141 = vmatprep.subr.mxu0 0.0
        %1142 = vmatpush2.msra.mxu0 0.0
        %1143 = vmatprep.subr.mxu0 0.0
        %1144 = vmatpush2.msra.mxu0 0.0
        %1145 = vmatprep.subr.mxu0 0.0
        %1146 = vmatpush2.msra.mxu0 0.0
        %1147 = vmatprep.subr.mxu0 0.0
        %1148 = vmatpush2.msra.mxu0 0.0
        %1149 = vmatprep.subr.mxu0 0.0
        %1150 = vmatpush2.msra.mxu0 0.0
        %1151 = vmatprep.subr.mxu0 0.0
        %1152 = vmatpush2.msra.mxu0 0.0
        %1153 = vmatprep.subr.mxu0 0.0
        %1154 = vmatpush2.msra.mxu0 0.0
        %1155 = vmatprep.subr.mxu0 0.0
        %1156 = vmatpush2.msra.mxu0 0.0
        %1157 = vmatprep.subr.mxu0 0.0
        %1158 = vmatpush2.msra.mxu0 0.0
        %1159 = vmatprep.subr.mxu0 0.0
        %1160 = vmatpush2.msra.mxu0 0.0
        %1161 = vmatprep.subr.mxu0 0.0
        %1162 = vmatpush2.msra.mxu0 0.0
        %1163 = vmatprep.subr.mxu0 0.0
        %1164 = vmatpush2.msra.mxu0 0.0
        %1165 = vmatprep.mubr.f32.mxu0 0.0
        %v1166 = vand.u32 %v315, 4294901760
        %1167 = vmatmul.mubr.f32.gmra.mxu0 %v1166
        %v1168 = vpop.f32.mrf.mxu0
        %v1169 = vadd.f32 %v1091, %v1168
        %v1170 = vpop.f32.mrf.mxu0
        %v1171 = vadd.f32 %v1093, %v1170
        %1172 = vdwg.mxu0
        %1173 = vmatprep.subr.mxu0 0.0
        %1174 = vmatpush1.msra.mxu0 0.0
        %1175 = vmatprep.subr.mxu0 0.0
        %1176 = vmatpush1.msra.mxu0 0.0
        %1177 = vmatprep.subr.mxu0 0.0
        %1178 = vmatpush1.msra.mxu0 0.0
        %1179 = vmatprep.subr.mxu0 0.0
        %1180 = vmatpush1.msra.mxu0 0.0
        %1181 = vmatprep.subr.mxu0 0.0
        %1182 = vmatpush1.msra.mxu0 0.0
        %1183 = vmatprep.subr.mxu0 0.0
        %1184 = vmatpush1.msra.mxu0 0.0
        %1185 = vmatprep.subr.mxu0 0.0
        %1186 = vmatpush1.msra.mxu0 0.0
        %1187 = vmatprep.subr.mxu0 0.0
        %1188 = vmatpush1.msra.mxu0 0.0
        %1189 = vmatprep.subr.mxu0 0.0
        %1190 = vmatpush1.msra.mxu0 0.0
        %1191 = vmatprep.subr.mxu0 0.0
        %1192 = vmatpush1.msra.mxu0 0.0
        %1193 = vmatprep.subr.mxu0 0.0
        %1194 = vmatpush1.msra.mxu0 0.0
        %1195 = vmatprep.subr.mxu0 0.0
        %1196 = vmatpush1.msra.mxu0 0.0
        %1197 = vmatprep.subr.mxu0 0.0
        %1198 = vmatpush1.msra.mxu0 0.0
        %1199 = vmatprep.subr.mxu0 0.0
        %1200 = vmatpush1.msra.mxu0 0.0
        %1201 = vmatprep.subr.mxu0 0.0
        %1202 = vmatpush1.msra.mxu0 0.0
        %v1203 = vand.u32 %v279, 4294901760
        %1204 = vmatprep.subr.mxu0 %v1203
        %v1205 = vand.u32 %v278, 4294901760
        %1206 = vmatpush1.msra.mxu0 %v1205
        %1207 = vmatprep.subr.mxu0 0.0
        %1208 = vmatpush2.msra.mxu0 0.0
        %1209 = vmatprep.subr.mxu0 0.0
        %1210 = vmatpush2.msra.mxu0 0.0
        %1211 = vmatprep.subr.mxu0 0.0
        %1212 = vmatpush2.msra.mxu0 0.0
        %1213 = vmatprep.subr.mxu0 0.0
        %1214 = vmatpush2.msra.mxu0 0.0
        %1215 = vmatprep.subr.mxu0 0.0
        %1216 = vmatpush2.msra.mxu0 0.0
        %1217 = vmatprep.subr.mxu0 0.0
        %1218 = vmatpush2.msra.mxu0 0.0
        %1219 = vmatprep.subr.mxu0 0.0
        %1220 = vmatpush2.msra.mxu0 0.0
        %1221 = vmatprep.subr.mxu0 0.0
        %1222 = vmatpush2.msra.mxu0 0.0
        %1223 = vmatprep.subr.mxu0 0.0
        %1224 = vmatpush2.msra.mxu0 0.0
        %1225 = vmatprep.subr.mxu0 0.0
        %1226 = vmatpush2.msra.mxu0 0.0
        %1227 = vmatprep.subr.mxu0 0.0
        %1228 = vmatpush2.msra.mxu0 0.0
        %1229 = vmatprep.subr.mxu0 0.0
        %1230 = vmatpush2.msra.mxu0 0.0
        %1231 = vmatprep.subr.mxu0 0.0
        %1232 = vmatpush2.msra.mxu0 0.0
        %1233 = vmatprep.subr.mxu0 0.0
        %1234 = vmatpush2.msra.mxu0 0.0
        %1235 = vmatprep.subr.mxu0 0.0
        %1236 = vmatpush2.msra.mxu0 0.0
        %1237 = vmatprep.subr.mxu0 0.0
        %1238 = vmatpush2.msra.mxu0 0.0
        %1239 = vmatprep.mubr.f32.mxu0 0.0
        %v1240 = vand.u32 %v315, 4294901760
        %1241 = vmatmul.mubr.f32.gmra.mxu0 %v1240
        %v1242 = vpop.f32.mrf.mxu0
        %v1243 = vadd.f32 %v1169, %v1242
        %v1244 = vpop.f32.mrf.mxu0
        %v1245 = vadd.f32 %v1171, %v1244
        %1246 = vdwg.mxu0
        %1247 = vst [vmem:[%s258] sm:$0xff] %v778
        %1248 = vst [vmem:[%s258 + $0x8] sm:$0xff] %v780
        %1249 = vst [vmem:[%s258 + $0x10] sm:$0xff] %v1243
        %1250 = vst [vmem:[%s258 + $0x18] sm:$0xff] %v1245
        %v1255 = vcombine.high %v778, %v780
        %v1256 = vcombine.high %v1243, %v1245
        %v1258 = vunpack.c.l.s4 1966171168
        %v1259 = vunpack.c.0.s8 %v1258
        %v1260 = vlaneseq
        %v1261 = vshrl.u32 %v1260, 7
        %v1262 = vsub.s32 %v1259, %v1261
        %v1263 = vrot.slane %v1255, %v1262
        %v1265 = vunpack.c.l.s4 1966171168
        %v1266 = vunpack.c.0.s8 %v1265
        %v1267 = vlaneseq
        %v1268 = vshrl.u32 %v1267, 7
        %v1269 = vsub.s32 %v1266, %v1268
        %v1270 = vrot.slane %v1256, %v1269
        %v1271 = vcombine.high %v1263, %v1270
        %v1273 = vunpack.c.l.s4 1966171168
        %v1274 = vunpack.c.0.s8 %v1273
        %v1275 = vlaneseq
        %v1276 = vshrl.u32 %v1275, 7
        %v1277 = vsub.s32 %v1274, %v1276
        %v1278 = vrot.slane %v1271, %v1277
        %v1279 = vcombine.high %v1278, %v1278
        %v1281 = vlaneseq
        %vm1282 = vcmp.ge.s32.totalorder %v1281, 0
        %vm1283 = vcmp.lt.s32.totalorder %v1281, 512
        %vm1284 = vmand %vm1282, %vm1283
        %1285 = vst.msk [vmem:[#allocation2] sm:$0xf] %vm1284, %v1279
        %s1286 = sand.u32 %s140, 1
        %s1287 = scalar_lea.sflag [#allocation5], %s1286
        %s1288 = sand.u32 %s140, 1
        %s1289 = smul.addr %s1288, 32
        %s1290 = scalar_lea.vmem [#allocation8], %s1289
        // Predicated region
        $region49: #{tpu_custom_call.1} parent=35 // pred_check
          %p1291 = pneg %p150
        $region50: #{tpu_custom_call.1} parent=35 // pred_check_branch
          %1293 = sbr.rel (%p1291) target = $region52
        $region51: #{tpu_custom_call.1} parent=35 // pred_region
          %s1294 = smul.u32 4, %s26
          %s1296 = ssub.s32 512, 512
          %1297 = vsyncadd %s1287, %s1296
          %s1298 = smul.addr %s27, 8
          %s1299 = sadd.s32 %s1294, %s1298
          %s1300 = smul.addr %s1299, 128
          %s1301 = scalar_lea.hbm %s4, %s1300
          %s1303 = sshll.u32 %s1290, 4
          %s1304 = int_to_ptr.vmem [resolvable:$true] %s1303
          %1306 = dma.vmem_to_hbm [thread:$0]  %s1304, 512, %s1301, %s1287
        $region52: #{tpu_custom_call.1} parent=35 // pred_fallthru
          _
      $region36: #{tpu_custom_call.1} parent=5 // pred_fallthru
        _
      %p1307 = scmp.le.s32.totalorder 2, %s17
      // Predicated region
      $region53: #{tpu_custom_call.1} parent=5 // pred_check
        %p1308 = pneg %p1307
      $region54: #{tpu_custom_call.1} parent=5 // pred_check_branch
        %1310 = sbr.rel (%p1308) target = $region56
      $region55: #{tpu_custom_call.1} parent=5 // pred_region
        %s1311 = ssub.s32 %s17, 2
        // Predicated region
        $region57: #{tpu_custom_call.1} parent=55 // pred_check
          %p1312 = pneg %p156
        $region58: #{tpu_custom_call.1} parent=55 // pred_check_branch
          %1314 = sbr.rel (%p1312) target = $region60
        $region59: #{tpu_custom_call.1} parent=55 // pred_region
          %s1315 = sand.u32 %s141, 1
          %s1316 = scalar_lea.sflag [#allocation5], %s1315
          %s1317 = sand.u32 %s141, 1
          %s1318 = smul.addr %s1317, 32
          %s1319 = scalar_lea.vmem [#allocation8], %s1318
          %1320 = dma.done %s1316, 512
        $region60: #{tpu_custom_call.1} parent=55 // pred_fallthru
          _
      $region56: #{tpu_custom_call.1} parent=5 // pred_fallthru
        _
    $region6: #{tpu_custom_call.1} parent=1 // loop_footer
      %s21 = sadd.s32 1, %s17
    $region7: #{tpu_custom_call.1} parent=1 // loop_footer_branch
      %16 = sbr.rel target = $region3
    $region8: #{tpu_custom_call.1} parent=1 // loop_exit
      _
    %1321 = vsyncpa [#allocation4], 1
    %s1322 = scalar_lea.sflag [#allocation4], 1
    %1323 = vsyncpa %s1322, 1
    %1324 = vsyncpa [#allocation7], 1
    %1325 = vsyncpa [#allocation5], 1
    %s1326 = scalar_lea.sflag [#allocation5], 1
    %1327 = vsyncpa %s1326, 1

</llo_original>
